<compile_context>
chip_gen: v7x
topology: tpu7x:2x2x1
jax: 0.10.0
libtpu: 0.0.40
codegen_flags: <defaults>
</compile_context>

<pallas_src>
import functools

import jax
import jax.numpy as jnp
from jax.experimental import pallas as pl
from jax.experimental.pallas import tpu as pltpu

_LANE = 128
_SUBLANE = 8


def _round_up(v: int, m: int) -> int:
    return (v + m - 1) // m * m


def _sigmoid(v):
    # exp -> EUP slot, divide -> VPU; same formula as the reference.
    return 1.0 / (1.0 + jnp.exp(-v))


def _onehot_ff_kernel(x_ref, w_in_ref, b_in_ref, w_h_ref, b_h_ref,
                      w_out_ref, b_out_ref, o_ref):
    """Fused MLP: linear -> sigmoid -> L x (linear -> sigmoid) -> linear."""
    h = _sigmoid(
        jnp.dot(x_ref[...], w_in_ref[...],
                preferred_element_type=jnp.float32) + b_in_ref[...])

    num_hidden = w_h_ref.shape[0]

    def layer(l, h):
        return _sigmoid(
            jnp.dot(h, w_h_ref[l],
                    preferred_element_type=jnp.float32) + b_h_ref[l])

    h = jax.lax.fori_loop(0, num_hidden, layer, h, unroll=True)

    out = jnp.dot(h, w_out_ref[...],
                  preferred_element_type=jnp.float32) + b_out_ref[...]
    o_ref[...] = out.astype(o_ref.dtype)


def init_params(key, output_size, hidden_layer_size, hidden_layer_count,
                input_size):
    """Deterministic synthetic parameters, stored as (in, out) like x @ W."""
    ks = jax.random.split(key, 2 * (hidden_layer_count + 2))
    it = iter(ks)

    def lin(k_w, k_b, fan_in, fan_out):
        bound = 1.0 / float(fan_in) ** 0.5   # torch Linear default-init bound
        w = jax.random.uniform(k_w, (fan_in, fan_out), jnp.float32,
                               -bound, bound)
        b = jax.random.uniform(k_b, (1, fan_out), jnp.float32, -bound, bound)
        return w, b

    w_in, b_in = lin(next(it), next(it), input_size, hidden_layer_size)
    w_hs, b_hs = [], []
    for _ in range(hidden_layer_count):
        w, b = lin(next(it), next(it), hidden_layer_size, hidden_layer_size)
        w_hs.append(w)
        b_hs.append(b)
    w_h = jnp.stack(w_hs, axis=0)            # (L, H, H)
    b_h = jnp.stack(b_hs, axis=0)            # (L, 1, H)
    w_out, b_out = lin(next(it), next(it), hidden_layer_size, output_size)
    return dict(w_in=w_in, b_in=b_in, w_h=w_h, b_h=b_h,
                w_out=w_out, b_out=b_out)


def pad_params(params):
    """Zero-pad all feature dims up to a multiple of 128 lanes."""
    d_in, hidden = params["w_in"].shape
    out = params["w_out"].shape[1]
    d_in_p = _round_up(d_in, _LANE)
    h_p = _round_up(hidden, _LANE)
    out_p = _round_up(out, _LANE)

    def pad_last2(a, rows, cols):
        pw = [(0, 0)] * (a.ndim - 2) + [(0, rows - a.shape[-2]),
                                        (0, cols - a.shape[-1])]
        return jnp.pad(a, pw)

    return dict(
        w_in=pad_last2(params["w_in"], d_in_p, h_p),
        b_in=pad_last2(params["b_in"], 1, h_p),
        w_h=pad_last2(params["w_h"], h_p, h_p),
        b_h=pad_last2(params["b_h"], 1, h_p),
        w_out=pad_last2(params["w_out"], h_p, out_p),
        b_out=pad_last2(params["b_out"], 1, out_p),
    )


@functools.partial(jax.jit, static_argnames=("output_size",))
def onehot_ff_forward(x, padded_params, *, output_size):
    """x: [..., input_size] (Linear applies to the last dim, like torch)."""
    lead = x.shape[:-1]
    d_in = x.shape[-1]
    xf = jnp.reshape(x, (-1, d_in)).astype(jnp.float32)
    batch = xf.shape[0]

    d_in_p, h_p = padded_params["w_in"].shape
    out_p = padded_params["w_out"].shape[1]
    num_hidden = padded_params["w_h"].shape[0]

    # Batch tile: >= 8 sublanes, capped at 256 rows (MXU M granule on v6e/v7x).
    tm = 256 if batch >= 256 else _round_up(max(batch, _SUBLANE), _SUBLANE)
    batch_p = _round_up(batch, tm)
    n_tiles = batch_p // tm

    xp = jnp.pad(xf, ((0, batch_p - batch), (0, d_in_p - d_in)))

    # Explicit scoped-VMEM budget: resident weights + double-buffered x/out
    # tiles + headroom, clamped below the v7x 64 MiB physical ceiling.
    param_bytes = sum(int(v.size) * 4 for v in padded_params.values())
    tile_bytes = (tm * d_in_p + tm * out_p) * 4
    vmem_limit = int(min(48 << 20,
                         max(2 * (param_bytes + tile_bytes) + (2 << 20),
                             8 << 20)))

    const2 = lambda i: (0, 0)
    const3 = lambda i: (0, 0, 0)

    out_padded = pl.pallas_call(
        _onehot_ff_kernel,
        out_shape=jax.ShapeDtypeStruct((batch_p, out_p), jnp.float32),
        grid=(n_tiles,),
        in_specs=[
            pl.BlockSpec((tm, d_in_p), lambda i: (i, 0)),        # x tile
            pl.BlockSpec((d_in_p, h_p), const2),                  # w_in (resident)
            pl.BlockSpec((1, h_p), const2),                       # b_in
            pl.BlockSpec((num_hidden, h_p, h_p), const3),         # w_h stack
            pl.BlockSpec((num_hidden, 1, h_p), const3),           # b_h stack
            pl.BlockSpec((h_p, out_p), const2),                   # w_out
            pl.BlockSpec((1, out_p), const2),                     # b_out
        ],
        out_specs=pl.BlockSpec((tm, out_p), lambda i: (i, 0)),
        compiler_params=pltpu.CompilerParams(
            dimension_semantics=("parallel",),
            vmem_limit_bytes=vmem_limit),
    )(xp, padded_params["w_in"], padded_params["b_in"],
      padded_params["w_h"], padded_params["b_h"],
      padded_params["w_out"], padded_params["b_out"])

    out = out_padded[:batch, :output_size]
    return jnp.reshape(out, lead + (output_size,))


def _reference_forward(x, params):
    """Pure-JAX reference (unpadded params) for correctness checking."""
    lead = x.shape[:-1]
    h = jnp.reshape(x, (-1, x.shape[-1])).astype(jnp.float32)
    h = _sigmoid(h @ params["w_in"] + params["b_in"])
    for l in range(params["w_h"].shape[0]):
        h = _sigmoid(h @ params["w_h"][l] + params["b_h"][l])
    out = h @ params["w_out"] + params["b_out"]
    return jnp.reshape(out, lead + (params["w_out"].shape[1],))


if __name__ == "__main__":
    # Small shapes consistent with the module's constructor signature.
    batch = 2
    input_size = 4
    hidden_layer_size = 32
    hidden_layer_count = 2
    output_size = 8

    key = jax.random.PRNGKey(0)
    k_params, k_x = jax.random.split(key)

    params = init_params(k_params, output_size, hidden_layer_size,
                         hidden_layer_count, input_size)
    padded = pad_params(params)

    # One-hot inputs (in the spirit of the module's name).
    idx = jax.random.randint(k_x, (batch,), 0, input_size)
    x = jax.nn.one_hot(idx, input_size, dtype=jnp.float32)

    out = onehot_ff_forward(x, padded, output_size=output_size)
    out = jax.block_until_ready(out)

    ref = _reference_forward(x, params)
    assert out.shape == (batch, output_size)
    assert jnp.allclose(out, ref, atol=1e-5, rtol=1e-5), "mismatch vs reference"

    print("KERNEL_OK")
</pallas_src>

<mosaic_0001>
module attributes {stable_mosaic.version = 11 : i64} {
  func.func @_onehot_ff_kernel(%arg0: i32, %arg1: memref<8x128xf32, #tpu.memory_space<vmem>>, %arg2: memref<128x128xf32, #tpu.memory_space<vmem>>, %arg3: memref<1x128xf32, #tpu.memory_space<vmem>>, %arg4: memref<2x128x128xf32, #tpu.memory_space<vmem>>, %arg5: memref<2x1x128xf32, #tpu.memory_space<vmem>>, %arg6: memref<128x128xf32, #tpu.memory_space<vmem>>, %arg7: memref<1x128xf32, #tpu.memory_space<vmem>>, %arg8: memref<8x128xf32, #tpu.memory_space<vmem>>) attributes {dimension_semantics = [#tpu.dimension_semantics<parallel>], iteration_bounds = array<i64: 1>, scalar_prefetch = 0 : i64, scratch_operands = 0 : i64, tpu.core_type = #tpu.core_type<tc>, window_params = [{transform_indices = @transform_0, window_bounds = array<i64: 8, 128>}, {pipeline_mode = #tpu.pipeline_mode<synchronous>, transform_indices = @transform_1, window_bounds = array<i64: 128, 128>}, {pipeline_mode = #tpu.pipeline_mode<synchronous>, transform_indices = @transform_2, window_bounds = array<i64: 1, 128>}, {pipeline_mode = #tpu.pipeline_mode<synchronous>, transform_indices = @transform_3, window_bounds = array<i64: 2, 128, 128>}, {pipeline_mode = #tpu.pipeline_mode<synchronous>, transform_indices = @transform_4, window_bounds = array<i64: 2, 1, 128>}, {pipeline_mode = #tpu.pipeline_mode<synchronous>, transform_indices = @transform_5, window_bounds = array<i64: 128, 128>}, {pipeline_mode = #tpu.pipeline_mode<synchronous>, transform_indices = @transform_6, window_bounds = array<i64: 1, 128>}, {transform_indices = @transform_7, window_bounds = array<i64: 8, 128>}]} {
    %c0 = arith.constant 0 : index
    %c0_0 = arith.constant 0 : index
    %0 = vector.load %arg1[%c0, %c0_0] : memref<8x128xf32, #tpu.memory_space<vmem>>, vector<8x128xf32>
    %c0_1 = arith.constant 0 : index
    %c0_2 = arith.constant 0 : index
    %1 = vector.load %arg2[%c0_1, %c0_2] : memref<128x128xf32, #tpu.memory_space<vmem>>, vector<128x128xf32>
    %cst = arith.constant dense<0.000000e+00> : vector<8x128xf32>
    %2 = tpu.matmul %0, %1, %cst {dimension_numbers = #tpu.dot_dimension_numbers<[1], [0], [0], [1], [0, 0, 1, 1], [], []>} : vector<8x128xf32>, vector<128x128xf32>, vector<8x128xf32> -> vector<8x128xf32>
    %c0_3 = arith.constant 0 : index
    %c0_4 = arith.constant 0 : index
    %3 = vector.load %arg3[%c0_3, %c0_4] : memref<1x128xf32, #tpu.memory_space<vmem>>, vector<1x128xf32>
    %4 = vector.broadcast %3 : vector<1x128xf32> to vector<8x128xf32>
    %5 = arith.addf %2, %4 : vector<8x128xf32>
    %cst_5 = arith.constant 0.000000e+00 : f32
    %6 = vector.broadcast %cst_5 : f32 to vector<8x128xf32>
    %7 = arith.subf %6, %5 : vector<8x128xf32>
    %8 = math.exp %7 : vector<8x128xf32>
    %cst_6 = arith.constant 1.000000e+00 : f32
    %9 = vector.broadcast %cst_6 : f32 to vector<8x128xf32>
    %10 = arith.addf %9, %8 : vector<8x128xf32>
    %cst_7 = arith.constant 1.000000e+00 : f32
    %11 = vector.broadcast %cst_7 : f32 to vector<8x128xf32>
    %12 = arith.divf %11, %10 : vector<8x128xf32>
    %c0_i32 = arith.constant 0 : i32
    %13 = arith.index_cast %c0_i32 : i32 to index
    %c0_8 = arith.constant 0 : index
    %c0_9 = arith.constant 0 : index
    %14 = vector.load %arg4[%13, %c0_8, %c0_9] : memref<2x128x128xf32, #tpu.memory_space<vmem>>, vector<1x128x128xf32>
    %15 = vector.shape_cast %14 : vector<1x128x128xf32> to vector<128x128xf32>
    %cst_10 = arith.constant dense<0.000000e+00> : vector<8x128xf32>
    %16 = tpu.matmul %12, %15, %cst_10 {dimension_numbers = #tpu.dot_dimension_numbers<[1], [0], [0], [1], [0, 0, 1, 1], [], []>} : vector<8x128xf32>, vector<128x128xf32>, vector<8x128xf32> -> vector<8x128xf32>
    %17 = arith.index_cast %c0_i32 : i32 to index
    %c0_11 = arith.constant 0 : index
    %c0_12 = arith.constant 0 : index
    %18 = vector.load %arg5[%17, %c0_11, %c0_12] : memref<2x1x128xf32, #tpu.memory_space<vmem>>, vector<1x1x128xf32>
    %19 = vector.shape_cast %18 : vector<1x1x128xf32> to vector<1x128xf32>
    %20 = vector.broadcast %19 : vector<1x128xf32> to vector<8x128xf32>
    %21 = arith.addf %16, %20 : vector<8x128xf32>
    %cst_13 = arith.constant 0.000000e+00 : f32
    %22 = vector.broadcast %cst_13 : f32 to vector<8x128xf32>
    %23 = arith.subf %22, %21 : vector<8x128xf32>
    %24 = math.exp %23 : vector<8x128xf32>
    %cst_14 = arith.constant 1.000000e+00 : f32
    %25 = vector.broadcast %cst_14 : f32 to vector<8x128xf32>
    %26 = arith.addf %25, %24 : vector<8x128xf32>
    %cst_15 = arith.constant 1.000000e+00 : f32
    %27 = vector.broadcast %cst_15 : f32 to vector<8x128xf32>
    %28 = arith.divf %27, %26 : vector<8x128xf32>
    %c1_i32 = arith.constant 1 : i32
    %29 = arith.index_cast %c1_i32 : i32 to index
    %c0_16 = arith.constant 0 : index
    %c0_17 = arith.constant 0 : index
    %30 = vector.load %arg4[%29, %c0_16, %c0_17] : memref<2x128x128xf32, #tpu.memory_space<vmem>>, vector<1x128x128xf32>
    %31 = vector.shape_cast %30 : vector<1x128x128xf32> to vector<128x128xf32>
    %cst_18 = arith.constant dense<0.000000e+00> : vector<8x128xf32>
    %32 = tpu.matmul %28, %31, %cst_18 {dimension_numbers = #tpu.dot_dimension_numbers<[1], [0], [0], [1], [0, 0, 1, 1], [], []>} : vector<8x128xf32>, vector<128x128xf32>, vector<8x128xf32> -> vector<8x128xf32>
    %33 = arith.index_cast %c1_i32 : i32 to index
    %c0_19 = arith.constant 0 : index
    %c0_20 = arith.constant 0 : index
    %34 = vector.load %arg5[%33, %c0_19, %c0_20] : memref<2x1x128xf32, #tpu.memory_space<vmem>>, vector<1x1x128xf32>
    %35 = vector.shape_cast %34 : vector<1x1x128xf32> to vector<1x128xf32>
    %36 = vector.broadcast %35 : vector<1x128xf32> to vector<8x128xf32>
    %37 = arith.addf %32, %36 : vector<8x128xf32>
    %cst_21 = arith.constant 0.000000e+00 : f32
    %38 = vector.broadcast %cst_21 : f32 to vector<8x128xf32>
    %39 = arith.subf %38, %37 : vector<8x128xf32>
    %40 = math.exp %39 : vector<8x128xf32>
    %cst_22 = arith.constant 1.000000e+00 : f32
    %41 = vector.broadcast %cst_22 : f32 to vector<8x128xf32>
    %42 = arith.addf %41, %40 : vector<8x128xf32>
    %cst_23 = arith.constant 1.000000e+00 : f32
    %43 = vector.broadcast %cst_23 : f32 to vector<8x128xf32>
    %44 = arith.divf %43, %42 : vector<8x128xf32>
    %c2_i32 = arith.constant 2 : i32
    %c0_24 = arith.constant 0 : index
    %c0_25 = arith.constant 0 : index
    %45 = vector.load %arg6[%c0_24, %c0_25] : memref<128x128xf32, #tpu.memory_space<vmem>>, vector<128x128xf32>
    %cst_26 = arith.constant dense<0.000000e+00> : vector<8x128xf32>
    %46 = tpu.matmul %44, %45, %cst_26 {dimension_numbers = #tpu.dot_dimension_numbers<[1], [0], [0], [1], [0, 0, 1, 1], [], []>} : vector<8x128xf32>, vector<128x128xf32>, vector<8x128xf32> -> vector<8x128xf32>
    %c0_27 = arith.constant 0 : index
    %c0_28 = arith.constant 0 : index
    %47 = vector.load %arg7[%c0_27, %c0_28] : memref<1x128xf32, #tpu.memory_space<vmem>>, vector<1x128xf32>
    %48 = vector.broadcast %47 : vector<1x128xf32> to vector<8x128xf32>
    %49 = arith.addf %46, %48 : vector<8x128xf32>
    %c0_29 = arith.constant 0 : index
    %c0_30 = arith.constant 0 : index
    %50 = vector.load %arg8[%c0_29, %c0_30] : memref<8x128xf32, #tpu.memory_space<vmem>>, vector<8x128xf32>
    tpu.vector_store %arg8[%c0_29, %c0_30], %49 {strides = array<i32>} : memref<8x128xf32, #tpu.memory_space<vmem>>, vector<8x128xf32>,
    return
  }
  func.func @transform_0(%arg0: i32) -> (i32, i32) {
    %c0_i32 = arith.constant 0 : i32
    %c0_i32_0 = arith.constant 0 : i32
    return %arg0, %c0_i32 : i32, i32
  }
  func.func @transform_1(%arg0: i32) -> (i32, i32) {
    %c0_i32 = arith.constant 0 : i32
    %c0_i32_0 = arith.constant 0 : i32
    %c0_i32_1 = arith.constant 0 : i32
    return %c0_i32, %c0_i32_0 : i32, i32
  }
  func.func @transform_2(%arg0: i32) -> (i32, i32) {
    %c0_i32 = arith.constant 0 : i32
    %c0_i32_0 = arith.constant 0 : i32
    %c0_i32_1 = arith.constant 0 : i32
    return %c0_i32, %c0_i32_0 : i32, i32
  }
  func.func @transform_3(%arg0: i32) -> (i32, i32, i32) {
    %c0_i32 = arith.constant 0 : i32
    %c0_i32_0 = arith.constant 0 : i32
    %c0_i32_1 = arith.constant 0 : i32
    %c0_i32_2 = arith.constant 0 : i32
    return %c0_i32, %c0_i32_0, %c0_i32_1 : i32, i32, i32
  }
  func.func @transform_4(%arg0: i32) -> (i32, i32, i32) {
    %c0_i32 = arith.constant 0 : i32
    %c0_i32_0 = arith.constant 0 : i32
    %c0_i32_1 = arith.constant 0 : i32
    %c0_i32_2 = arith.constant 0 : i32
    return %c0_i32, %c0_i32_0, %c0_i32_1 : i32, i32, i32
  }
  func.func @transform_5(%arg0: i32) -> (i32, i32) {
    %c0_i32 = arith.constant 0 : i32
    %c0_i32_0 = arith.constant 0 : i32
    %c0_i32_1 = arith.constant 0 : i32
    return %c0_i32, %c0_i32_0 : i32, i32
  }
  func.func @transform_6(%arg0: i32) -> (i32, i32) {
    %c0_i32 = arith.constant 0 : i32
    %c0_i32_0 = arith.constant 0 : i32
    %c0_i32_1 = arith.constant 0 : i32
    return %c0_i32, %c0_i32_0 : i32, i32
  }
  func.func @transform_7(%arg0: i32) -> (i32, i32) {
    %c0_i32 = arith.constant 0 : i32
    %c0_i32_0 = arith.constant 0 : i32
    return %arg0, %c0_i32 : i32, i32
  }
}

</mosaic_0001>

<llo_original>
// kernel: onehot_ff_forward.1
$region0: #{onehot_ff_forward.1}
  #allocation0 [shape = 'u32[]', space=smem, size = 0x4, offset = 0x4, fixed_abs, tag = 'smem constant byte address 0x4 - core index']
  #allocation1 [shape = 'u32[144,128]{1,0:T(1,128)}', space=vmem, size = 0x12000, scoped, tag = 'internal scratch']
  %s0 = inlined_call_operand.vmem [shape: f32[8,128], index: 0, kind: input, shape index: {}]
  %s1 = inlined_call_operand.hbm [shape: f32[128,128], index: 1, kind: input, shape index: {}]
  %s2 = inlined_call_operand.vmem [shape: f32[1,128], index: 2, kind: input, shape index: {}]
  %s3 = inlined_call_operand.hbm [shape: f32[2,128,128], index: 3, kind: input, shape index: {}]
  %s4 = inlined_call_operand.vmem [shape: f32[2,1,128], index: 4, kind: input, shape index: {}]
  %s5 = inlined_call_operand.hbm [shape: f32[128,128], index: 5, kind: input, shape index: {}]
  %s6 = inlined_call_operand.vmem [shape: f32[1,128], index: 6, kind: input, shape index: {}]
  %s7 = inlined_call_operand.vmem [shape: f32[8,128], index: 7, kind: output, shape index: {}]
  %s8 = sld [smem:[#allocation0]]
  $region50: #{onehot_ff_forward.1} parent=0
    _
  %s10 = ssub.s32 1, %s8
  %s11 = scalar_select 0, %s10, %s8
  $region1: #{onehot_ff_forward.1} parent=0
    #allocation2 [shape = 'u8[65536]{0}', space=vmem, size = 0x10000, scoped, tag = 'input window, operand 1, single buffered']
    #allocation3 [shape = 's32[1]{0}', space=sflag, size = 0x4, scoped, tag = 'scoped memory for onehot_ff_forward.1']
    #allocation4 [shape = 'u8[131072]{0}', space=vmem, size = 0x20000, scoped, tag = 'input window, operand 3, single buffered']
    #allocation5 [shape = 's32[1]{0}', space=sflag, size = 0x4, scoped, tag = 'scoped memory for onehot_ff_forward.1']
    #allocation6 [shape = 'u8[65536]{0}', space=vmem, size = 0x10000, scoped, tag = 'input window, operand 5, single buffered']
    %12 = vsyncpa [#allocation3], 0
    %13 = vsyncpa [#allocation5], 0
    // Predicated region
    $region2: #{onehot_ff_forward.1} parent=1 // pred_check
      _
    $region3: #{onehot_ff_forward.1} parent=1 // pred_check_branch
      %15 = sbr.rel (0) target = $region5
    $region4: #{onehot_ff_forward.1} parent=1 // pred_region
      _
    $region5: #{onehot_ff_forward.1} parent=1 // pred_fallthru
      _
    // Predicated region
    $region6: #{onehot_ff_forward.1} parent=1 // pred_check
      _
    $region7: #{onehot_ff_forward.1} parent=1 // pred_check_branch
      %17 = sbr.rel (0) target = $region9
    $region8: #{onehot_ff_forward.1} parent=1 // pred_region
      %s19 = ssub.s32 2048, 2048
      %20 = vsyncadd [#allocation3], %s19
      %s21 = sshll.u32 [#allocation2], 4
      %s22 = int_to_ptr.vmem [resolvable:$true] %s21
      %27 = dma.hbm_to_vmem [thread:$0]  %s1, 2048, %s22, [#allocation3], 128, 128, 8
    $region9: #{onehot_ff_forward.1} parent=1 // pred_fallthru
      _
    // Predicated region
    $region10: #{onehot_ff_forward.1} parent=1 // pred_check
      _
    $region11: #{onehot_ff_forward.1} parent=1 // pred_check_branch
      %29 = sbr.rel (0) target = $region13
    $region12: #{onehot_ff_forward.1} parent=1 // pred_region
      _
    $region13: #{onehot_ff_forward.1} parent=1 // pred_fallthru
      _
    // Predicated region
    $region14: #{onehot_ff_forward.1} parent=1 // pred_check
      _
    $region15: #{onehot_ff_forward.1} parent=1 // pred_check_branch
      %31 = sbr.rel (0) target = $region17
    $region16: #{onehot_ff_forward.1} parent=1 // pred_region
      %s33 = ssub.s32 4096, 4096
      %34 = vsyncadd [#allocation5], %s33
      %s35 = sshll.u32 [#allocation4], 4
      %s36 = int_to_ptr.vmem [resolvable:$true] %s35
      %41 = dma.hbm_to_vmem [thread:$0]  %s3, 4096, %s36, [#allocation5], 128, 128, 8
    $region17: #{onehot_ff_forward.1} parent=1 // pred_fallthru
      _
    // Predicated region
    $region18: #{onehot_ff_forward.1} parent=1 // pred_check
      _
    $region19: #{onehot_ff_forward.1} parent=1 // pred_check_branch
      %43 = sbr.rel (0) target = $region21
    $region20: #{onehot_ff_forward.1} parent=1 // pred_region
      _
    $region21: #{onehot_ff_forward.1} parent=1 // pred_fallthru
      _
    // Predicated region
    $region22: #{onehot_ff_forward.1} parent=1 // pred_check
      _
    $region23: #{onehot_ff_forward.1} parent=1 // pred_check_branch
      %45 = sbr.rel (0) target = $region25
    $region24: #{onehot_ff_forward.1} parent=1 // pred_region
      %s47 = ssub.s32 2048, 2048
      %48 = vsyncadd [#allocation5], %s47
      %s49 = sshll.u32 [#allocation6], 4
      %s50 = int_to_ptr.vmem [resolvable:$true] %s49
      %55 = dma.hbm_to_vmem [thread:$0]  %s5, 2048, %s50, [#allocation5], 128, 128, 8
    $region25: #{onehot_ff_forward.1} parent=1 // pred_fallthru
      _
    // Predicated region
    $region26: #{onehot_ff_forward.1} parent=1 // pred_check
      _
    $region27: #{onehot_ff_forward.1} parent=1 // pred_check_branch
      %57 = sbr.rel (0) target = $region29
    $region28: #{onehot_ff_forward.1} parent=1 // pred_region
      _
    $region29: #{onehot_ff_forward.1} parent=1 // pred_fallthru
      _
    // Predicated region
    $region30: #{onehot_ff_forward.1} parent=1 // pred_check
      _
    $region31: #{onehot_ff_forward.1} parent=1 // pred_check_branch
      %59 = sbr.rel (0) target = $region33
    $region32: #{onehot_ff_forward.1} parent=1 // pred_region
      %60 = dma.done [#allocation3], 2048
    $region33: #{onehot_ff_forward.1} parent=1 // pred_fallthru
      _
    // Predicated region
    $region34: #{onehot_ff_forward.1} parent=1 // pred_check
      _
    $region35: #{onehot_ff_forward.1} parent=1 // pred_check_branch
      %62 = sbr.rel (0) target = $region37
    $region36: #{onehot_ff_forward.1} parent=1 // pred_region
      %63 = dma.done [#allocation5], 4096
    $region37: #{onehot_ff_forward.1} parent=1 // pred_fallthru
      _
    // Predicated region
    $region38: #{onehot_ff_forward.1} parent=1 // pred_check
      _
    $region39: #{onehot_ff_forward.1} parent=1 // pred_check_branch
      %65 = sbr.rel (0) target = $region41
    $region40: #{onehot_ff_forward.1} parent=1 // pred_region
      %66 = dma.done [#allocation5], 2048
    $region41: #{onehot_ff_forward.1} parent=1 // pred_fallthru
      _
    %v67 = vld [vmem:[%s0] sm:$0xff]
    %v68 = vld [vmem:[#allocation2] sm:$0xff]
    %v69 = vld [vmem:[#allocation2 + $0x8] sm:$0xff]
    %v70 = vld [vmem:[#allocation2 + $0x10] sm:$0xff]
    %v71 = vld [vmem:[#allocation2 + $0x18] sm:$0xff]
    %v72 = vld [vmem:[#allocation2 + $0x20] sm:$0xff]
    %v73 = vld [vmem:[#allocation2 + $0x28] sm:$0xff]
    %v74 = vld [vmem:[#allocation2 + $0x30] sm:$0xff]
    %v75 = vld [vmem:[#allocation2 + $0x38] sm:$0xff]
    %v76 = vld [vmem:[#allocation2 + $0x40] sm:$0xff]
    %v77 = vld [vmem:[#allocation2 + $0x48] sm:$0xff]
    %v78 = vld [vmem:[#allocation2 + $0x50] sm:$0xff]
    %v79 = vld [vmem:[#allocation2 + $0x58] sm:$0xff]
    %v80 = vld [vmem:[#allocation2 + $0x60] sm:$0xff]
    %v81 = vld [vmem:[#allocation2 + $0x68] sm:$0xff]
    %v82 = vld [vmem:[#allocation2 + $0x70] sm:$0xff]
    %v83 = vld [vmem:[#allocation2 + $0x78] sm:$0xff]
    %v84 = vld [vmem:[%s2] sm:$0x1]
    %v86 = vlaneseq
    %v87 = vshrl.u32 %v86, 7
    %v88 = vsub.s32 0, %v87
    %v89 = vrot.slane %v84, %v88
    %91 = vmatprep.subr.mxu0 0.0
    %92 = vmatpush1.msra.mxu0 %v68
    %93 = vmatprep.subr.mxu0 0.0
    %94 = vmatpush1.msra.mxu0 %v69
    %95 = vmatprep.subr.mxu0 0.0
    %96 = vmatpush1.msra.mxu0 %v70
    %97 = vmatprep.subr.mxu0 0.0
    %98 = vmatpush1.msra.mxu0 %v71
    %99 = vmatprep.subr.mxu0 0.0
    %100 = vmatpush1.msra.mxu0 %v72
    %101 = vmatprep.subr.mxu0 0.0
    %102 = vmatpush1.msra.mxu0 %v73
    %103 = vmatprep.subr.mxu0 0.0
    %104 = vmatpush1.msra.mxu0 %v74
    %105 = vmatprep.subr.mxu0 0.0
    %106 = vmatpush1.msra.mxu0 %v75
    %107 = vmatprep.subr.mxu0 0.0
    %108 = vmatpush1.msra.mxu0 %v76
    %109 = vmatprep.subr.mxu0 0.0
    %110 = vmatpush1.msra.mxu0 %v77
    %111 = vmatprep.subr.mxu0 0.0
    %112 = vmatpush1.msra.mxu0 %v78
    %113 = vmatprep.subr.mxu0 0.0
    %114 = vmatpush1.msra.mxu0 %v79
    %115 = vmatprep.subr.mxu0 0.0
    %116 = vmatpush1.msra.mxu0 %v80
    %117 = vmatprep.subr.mxu0 0.0
    %118 = vmatpush1.msra.mxu0 %v81
    %119 = vmatprep.subr.mxu0 0.0
    %120 = vmatpush1.msra.mxu0 %v82
    %121 = vmatprep.subr.mxu0 0.0
    %122 = vmatpush1.msra.mxu0 %v83
    %123 = vmatprep.subr.mxu0 0.0
    %124 = vmatpush1.msra.mxu0 0.0
    %125 = vmatprep.subr.mxu0 0.0
    %126 = vmatpush1.msra.mxu0 0.0
    %127 = vmatprep.subr.mxu0 0.0
    %128 = vmatpush1.msra.mxu0 0.0
    %129 = vmatprep.subr.mxu0 0.0
    %130 = vmatpush1.msra.mxu0 0.0
    %131 = vmatprep.subr.mxu0 0.0
    %132 = vmatpush1.msra.mxu0 0.0
    %133 = vmatprep.subr.mxu0 0.0
    %134 = vmatpush1.msra.mxu0 0.0
    %135 = vmatprep.subr.mxu0 0.0
    %136 = vmatpush1.msra.mxu0 0.0
    %137 = vmatprep.subr.mxu0 0.0
    %138 = vmatpush1.msra.mxu0 0.0
    %139 = vmatprep.subr.mxu0 0.0
    %140 = vmatpush1.msra.mxu0 0.0
    %141 = vmatprep.subr.mxu0 0.0
    %142 = vmatpush1.msra.mxu0 0.0
    %143 = vmatprep.subr.mxu0 0.0
    %144 = vmatpush1.msra.mxu0 0.0
    %145 = vmatprep.subr.mxu0 0.0
    %146 = vmatpush1.msra.mxu0 0.0
    %147 = vmatprep.subr.mxu0 0.0
    %148 = vmatpush1.msra.mxu0 0.0
    %149 = vmatprep.subr.mxu0 0.0
    %150 = vmatpush1.msra.mxu0 0.0
    %151 = vmatprep.subr.mxu0 0.0
    %152 = vmatpush1.msra.mxu0 0.0
    %153 = vmatprep.subr.mxu0 0.0
    %154 = vmatpush1.msra.mxu0 0.0
    %155 = vmatprep.mubr.f32.mxu0 0.0
    %156 = vmatmul.mubr.f32.gmra.mrb[0].mxu0 %v67
    %v157 = vpop.f32.mrb[0].mxu0
    %v158 = vadd.f32 %v89, %v157
    %v159 = vpop.f32.mrb[0].mxu0
    %160 = vdwg.mxu0
    %v161 = vsub.f32 0.0, %v158
    %v162 = vmul.f32 %v161, 1.442695
    %v163 = vpow.pop %v162
    %v164 = vadd.f32 %v163, 1.0
    %v165 = vrcp.pop %v164
    %v166 = vmul.f32 1.0, %v165
    %v167 = vld [vmem:[#allocation4] sm:$0xff]
    %v168 = vld [vmem:[#allocation4 + $0x8] sm:$0xff]
    %v169 = vld [vmem:[#allocation4 + $0x10] sm:$0xff]
    %v170 = vld [vmem:[#allocation4 + $0x18] sm:$0xff]
    %v171 = vld [vmem:[#allocation4 + $0x20] sm:$0xff]
    %v172 = vld [vmem:[#allocation4 + $0x28] sm:$0xff]
    %v173 = vld [vmem:[#allocation4 + $0x30] sm:$0xff]
    %v174 = vld [vmem:[#allocation4 + $0x38] sm:$0xff]
    %v175 = vld [vmem:[#allocation4 + $0x40] sm:$0xff]
    %v176 = vld [vmem:[#allocation4 + $0x48] sm:$0xff]
    %v177 = vld [vmem:[#allocation4 + $0x50] sm:$0xff]
    %v178 = vld [vmem:[#allocation4 + $0x58] sm:$0xff]
    %v179 = vld [vmem:[#allocation4 + $0x60] sm:$0xff]
    %v180 = vld [vmem:[#allocation4 + $0x68] sm:$0xff]
    %v181 = vld [vmem:[#allocation4 + $0x70] sm:$0xff]
    %v182 = vld [vmem:[#allocation4 + $0x78] sm:$0xff]
    %v183 = vld [vmem:[%s4] sm:$0x1]
    %v185 = vlaneseq
    %v186 = vshrl.u32 %v185, 7
    %v187 = vsub.s32 0, %v186
    %v188 = vrot.slane %v183, %v187
    %190 = vmatprep.subr.mxu0 0.0
    %191 = vmatpush1.msra.mxu0 %v167
    %192 = vmatprep.subr.mxu0 0.0
    %193 = vmatpush1.msra.mxu0 %v168
    %194 = vmatprep.subr.mxu0 0.0
    %195 = vmatpush1.msra.mxu0 %v169
    %196 = vmatprep.subr.mxu0 0.0
    %197 = vmatpush1.msra.mxu0 %v170
    %198 = vmatprep.subr.mxu0 0.0
    %199 = vmatpush1.msra.mxu0 %v171
    %200 = vmatprep.subr.mxu0 0.0
    %201 = vmatpush1.msra.mxu0 %v172
    %202 = vmatprep.subr.mxu0 0.0
    %203 = vmatpush1.msra.mxu0 %v173
    %204 = vmatprep.subr.mxu0 0.0
    %205 = vmatpush1.msra.mxu0 %v174
    %206 = vmatprep.subr.mxu0 0.0
    %207 = vmatpush1.msra.mxu0 %v175
    %208 = vmatprep.subr.mxu0 0.0
    %209 = vmatpush1.msra.mxu0 %v176
    %210 = vmatprep.subr.mxu0 0.0
    %211 = vmatpush1.msra.mxu0 %v177
    %212 = vmatprep.subr.mxu0 0.0
    %213 = vmatpush1.msra.mxu0 %v178
    %214 = vmatprep.subr.mxu0 0.0
    %215 = vmatpush1.msra.mxu0 %v179
    %216 = vmatprep.subr.mxu0 0.0
    %217 = vmatpush1.msra.mxu0 %v180
    %218 = vmatprep.subr.mxu0 0.0
    %219 = vmatpush1.msra.mxu0 %v181
    %220 = vmatprep.subr.mxu0 0.0
    %221 = vmatpush1.msra.mxu0 %v182
    %222 = vmatprep.subr.mxu0 0.0
    %223 = vmatpush1.msra.mxu0 0.0
    %224 = vmatprep.subr.mxu0 0.0
    %225 = vmatpush1.msra.mxu0 0.0
    %226 = vmatprep.subr.mxu0 0.0
    %227 = vmatpush1.msra.mxu0 0.0
    %228 = vmatprep.subr.mxu0 0.0
    %229 = vmatpush1.msra.mxu0 0.0
    %230 = vmatprep.subr.mxu0 0.0
    %231 = vmatpush1.msra.mxu0 0.0
    %232 = vmatprep.subr.mxu0 0.0
    %233 = vmatpush1.msra.mxu0 0.0
    %234 = vmatprep.subr.mxu0 0.0
    %235 = vmatpush1.msra.mxu0 0.0
    %236 = vmatprep.subr.mxu0 0.0
    %237 = vmatpush1.msra.mxu0 0.0
    %238 = vmatprep.subr.mxu0 0.0
    %239 = vmatpush1.msra.mxu0 0.0
    %240 = vmatprep.subr.mxu0 0.0
    %241 = vmatpush1.msra.mxu0 0.0
    %242 = vmatprep.subr.mxu0 0.0
    %243 = vmatpush1.msra.mxu0 0.0
    %244 = vmatprep.subr.mxu0 0.0
    %245 = vmatpush1.msra.mxu0 0.0
    %246 = vmatprep.subr.mxu0 0.0
    %247 = vmatpush1.msra.mxu0 0.0
    %248 = vmatprep.subr.mxu0 0.0
    %249 = vmatpush1.msra.mxu0 0.0
    %250 = vmatprep.subr.mxu0 0.0
    %251 = vmatpush1.msra.mxu0 0.0
    %252 = vmatprep.subr.mxu0 0.0
    %253 = vmatpush1.msra.mxu0 0.0
    %254 = vmatprep.mubr.f32.mxu0 0.0
    %255 = vmatmul.mubr.f32.gmra.mrb[0].mxu0 %v166
    %v256 = vpop.f32.mrb[0].mxu0
    %v257 = vadd.f32 %v188, %v256
    %v258 = vpop.f32.mrb[0].mxu0
    %259 = vdwg.mxu0
    %v260 = vsub.f32 0.0, %v257
    %v261 = vmul.f32 %v260, 1.442695
    %v262 = vpow.pop %v261
    %v263 = vadd.f32 %v262, 1.0
    %v264 = vrcp.pop %v263
    %v265 = vmul.f32 1.0, %v264
    %s266 = scalar_lea.vmem [#allocation4], 128
    %v267 = vld [vmem:[%s266] sm:$0xff]
    %v268 = vld [vmem:[%s266 + $0x8] sm:$0xff]
    %v269 = vld [vmem:[%s266 + $0x10] sm:$0xff]
    %v270 = vld [vmem:[%s266 + $0x18] sm:$0xff]
    %v271 = vld [vmem:[%s266 + $0x20] sm:$0xff]
    %v272 = vld [vmem:[%s266 + $0x28] sm:$0xff]
    %v273 = vld [vmem:[%s266 + $0x30] sm:$0xff]
    %v274 = vld [vmem:[%s266 + $0x38] sm:$0xff]
    %v275 = vld [vmem:[%s266 + $0x40] sm:$0xff]
    %v276 = vld [vmem:[%s266 + $0x48] sm:$0xff]
    %v277 = vld [vmem:[%s266 + $0x50] sm:$0xff]
    %v278 = vld [vmem:[%s266 + $0x58] sm:$0xff]
    %v279 = vld [vmem:[%s266 + $0x60] sm:$0xff]
    %v280 = vld [vmem:[%s266 + $0x68] sm:$0xff]
    %v281 = vld [vmem:[%s266 + $0x70] sm:$0xff]
    %v282 = vld [vmem:[%s266 + $0x78] sm:$0xff]
    %s283 = scalar_lea.vmem %s4, 1
    %v284 = vld [vmem:[%s283] sm:$0x1]
    %v286 = vlaneseq
    %v287 = vshrl.u32 %v286, 7
    %v288 = vsub.s32 0, %v287
    %v289 = vrot.slane %v284, %v288
    %291 = vmatprep.subr.mxu0 0.0
    %292 = vmatpush1.msra.mxu0 %v267
    %293 = vmatprep.subr.mxu0 0.0
    %294 = vmatpush1.msra.mxu0 %v268
    %295 = vmatprep.subr.mxu0 0.0
    %296 = vmatpush1.msra.mxu0 %v269
    %297 = vmatprep.subr.mxu0 0.0
    %298 = vmatpush1.msra.mxu0 %v270
    %299 = vmatprep.subr.mxu0 0.0
    %300 = vmatpush1.msra.mxu0 %v271
    %301 = vmatprep.subr.mxu0 0.0
    %302 = vmatpush1.msra.mxu0 %v272
    %303 = vmatprep.subr.mxu0 0.0
    %304 = vmatpush1.msra.mxu0 %v273
    %305 = vmatprep.subr.mxu0 0.0
    %306 = vmatpush1.msra.mxu0 %v274
    %307 = vmatprep.subr.mxu0 0.0
    %308 = vmatpush1.msra.mxu0 %v275
    %309 = vmatprep.subr.mxu0 0.0
    %310 = vmatpush1.msra.mxu0 %v276
    %311 = vmatprep.subr.mxu0 0.0
    %312 = vmatpush1.msra.mxu0 %v277
    %313 = vmatprep.subr.mxu0 0.0
    %314 = vmatpush1.msra.mxu0 %v278
    %315 = vmatprep.subr.mxu0 0.0
    %316 = vmatpush1.msra.mxu0 %v279
    %317 = vmatprep.subr.mxu0 0.0
    %318 = vmatpush1.msra.mxu0 %v280
    %319 = vmatprep.subr.mxu0 0.0
    %320 = vmatpush1.msra.mxu0 %v281
    %321 = vmatprep.subr.mxu0 0.0
    %322 = vmatpush1.msra.mxu0 %v282
    %323 = vmatprep.subr.mxu0 0.0
    %324 = vmatpush1.msra.mxu0 0.0
    %325 = vmatprep.subr.mxu0 0.0
    %326 = vmatpush1.msra.mxu0 0.0
    %327 = vmatprep.subr.mxu0 0.0
    %328 = vmatpush1.msra.mxu0 0.0
    %329 = vmatprep.subr.mxu0 0.0
    %330 = vmatpush1.msra.mxu0 0.0
    %331 = vmatprep.subr.mxu0 0.0
    %332 = vmatpush1.msra.mxu0 0.0
    %333 = vmatprep.subr.mxu0 0.0
    %334 = vmatpush1.msra.mxu0 0.0
    %335 = vmatprep.subr.mxu0 0.0
    %336 = vmatpush1.msra.mxu0 0.0
    %337 = vmatprep.subr.mxu0 0.0
    %338 = vmatpush1.msra.mxu0 0.0
    %339 = vmatprep.subr.mxu0 0.0
    %340 = vmatpush1.msra.mxu0 0.0
    %341 = vmatprep.subr.mxu0 0.0
    %342 = vmatpush1.msra.mxu0 0.0
    %343 = vmatprep.subr.mxu0 0.0
    %344 = vmatpush1.msra.mxu0 0.0
    %345 = vmatprep.subr.mxu0 0.0
    %346 = vmatpush1.msra.mxu0 0.0
    %347 = vmatprep.subr.mxu0 0.0
    %348 = vmatpush1.msra.mxu0 0.0
    %349 = vmatprep.subr.mxu0 0.0
    %350 = vmatpush1.msra.mxu0 0.0
    %351 = vmatprep.subr.mxu0 0.0
    %352 = vmatpush1.msra.mxu0 0.0
    %353 = vmatprep.subr.mxu0 0.0
    %354 = vmatpush1.msra.mxu0 0.0
    %355 = vmatprep.mubr.f32.mxu0 0.0
    %356 = vmatmul.mubr.f32.gmra.mrb[0].mxu0 %v265
    %v357 = vpop.f32.mrb[0].mxu0
    %v358 = vadd.f32 %v289, %v357
    %v359 = vpop.f32.mrb[0].mxu0
    %360 = vdwg.mxu0
    %v361 = vsub.f32 0.0, %v358
    %v362 = vmul.f32 %v361, 1.442695
    %v363 = vpow.pop %v362
    %v364 = vadd.f32 %v363, 1.0
    %v365 = vrcp.pop %v364
    %v366 = vmul.f32 1.0, %v365
    %v367 = vld [vmem:[#allocation6] sm:$0xff]
    %v368 = vld [vmem:[#allocation6 + $0x8] sm:$0xff]
    %v369 = vld [vmem:[#allocation6 + $0x10] sm:$0xff]
    %v370 = vld [vmem:[#allocation6 + $0x18] sm:$0xff]
    %v371 = vld [vmem:[#allocation6 + $0x20] sm:$0xff]
    %v372 = vld [vmem:[#allocation6 + $0x28] sm:$0xff]
    %v373 = vld [vmem:[#allocation6 + $0x30] sm:$0xff]
    %v374 = vld [vmem:[#allocation6 + $0x38] sm:$0xff]
    %v375 = vld [vmem:[#allocation6 + $0x40] sm:$0xff]
    %v376 = vld [vmem:[#allocation6 + $0x48] sm:$0xff]
    %v377 = vld [vmem:[#allocation6 + $0x50] sm:$0xff]
    %v378 = vld [vmem:[#allocation6 + $0x58] sm:$0xff]
    %v379 = vld [vmem:[#allocation6 + $0x60] sm:$0xff]
    %v380 = vld [vmem:[#allocation6 + $0x68] sm:$0xff]
    %v381 = vld [vmem:[#allocation6 + $0x70] sm:$0xff]
    %v382 = vld [vmem:[#allocation6 + $0x78] sm:$0xff]
    %v383 = vld [vmem:[%s6] sm:$0x1]
    %v385 = vlaneseq
    %v386 = vshrl.u32 %v385, 7
    %v387 = vsub.s32 0, %v386
    %v388 = vrot.slane %v383, %v387
    %390 = vmatprep.subr.mxu0 0.0
    %391 = vmatpush1.msra.mxu0 %v367
    %392 = vmatprep.subr.mxu0 0.0
    %393 = vmatpush1.msra.mxu0 %v368
    %394 = vmatprep.subr.mxu0 0.0
    %395 = vmatpush1.msra.mxu0 %v369
    %396 = vmatprep.subr.mxu0 0.0
    %397 = vmatpush1.msra.mxu0 %v370
    %398 = vmatprep.subr.mxu0 0.0
    %399 = vmatpush1.msra.mxu0 %v371
    %400 = vmatprep.subr.mxu0 0.0
    %401 = vmatpush1.msra.mxu0 %v372
    %402 = vmatprep.subr.mxu0 0.0
    %403 = vmatpush1.msra.mxu0 %v373
    %404 = vmatprep.subr.mxu0 0.0
    %405 = vmatpush1.msra.mxu0 %v374
    %406 = vmatprep.subr.mxu0 0.0
    %407 = vmatpush1.msra.mxu0 %v375
    %408 = vmatprep.subr.mxu0 0.0
    %409 = vmatpush1.msra.mxu0 %v376
    %410 = vmatprep.subr.mxu0 0.0
    %411 = vmatpush1.msra.mxu0 %v377
    %412 = vmatprep.subr.mxu0 0.0
    %413 = vmatpush1.msra.mxu0 %v378
    %414 = vmatprep.subr.mxu0 0.0
    %415 = vmatpush1.msra.mxu0 %v379
    %416 = vmatprep.subr.mxu0 0.0
    %417 = vmatpush1.msra.mxu0 %v380
    %418 = vmatprep.subr.mxu0 0.0
    %419 = vmatpush1.msra.mxu0 %v381
    %420 = vmatprep.subr.mxu0 0.0
    %421 = vmatpush1.msra.mxu0 %v382
    %422 = vmatprep.subr.mxu0 0.0
    %423 = vmatpush1.msra.mxu0 0.0
    %424 = vmatprep.subr.mxu0 0.0
    %425 = vmatpush1.msra.mxu0 0.0
    %426 = vmatprep.subr.mxu0 0.0
    %427 = vmatpush1.msra.mxu0 0.0
    %428 = vmatprep.subr.mxu0 0.0
    %429 = vmatpush1.msra.mxu0 0.0
    %430 = vmatprep.subr.mxu0 0.0
    %431 = vmatpush1.msra.mxu0 0.0
    %432 = vmatprep.subr.mxu0 0.0
    %433 = vmatpush1.msra.mxu0 0.0
    %434 = vmatprep.subr.mxu0 0.0
    %435 = vmatpush1.msra.mxu0 0.0
    %436 = vmatprep.subr.mxu0 0.0
    %437 = vmatpush1.msra.mxu0 0.0
    %438 = vmatprep.subr.mxu0 0.0
    %439 = vmatpush1.msra.mxu0 0.0
    %440 = vmatprep.subr.mxu0 0.0
    %441 = vmatpush1.msra.mxu0 0.0
    %442 = vmatprep.subr.mxu0 0.0
    %443 = vmatpush1.msra.mxu0 0.0
    %444 = vmatprep.subr.mxu0 0.0
    %445 = vmatpush1.msra.mxu0 0.0
    %446 = vmatprep.subr.mxu0 0.0
    %447 = vmatpush1.msra.mxu0 0.0
    %448 = vmatprep.subr.mxu0 0.0
    %449 = vmatpush1.msra.mxu0 0.0
    %450 = vmatprep.subr.mxu0 0.0
    %451 = vmatpush1.msra.mxu0 0.0
    %452 = vmatprep.subr.mxu0 0.0
    %453 = vmatpush1.msra.mxu0 0.0
    %454 = vmatprep.mubr.f32.mxu0 0.0
    %455 = vmatmul.mubr.f32.gmra.mrb[0].mxu0 %v366
    %v456 = vpop.f32.mrb[0].mxu0
    %v457 = vadd.f32 %v388, %v456
    %v458 = vpop.f32.mrb[0].mxu0
    %459 = vdwg.mxu0
    %460 = vst [vmem:[%s7] sm:$0xff] %v457
    // Predicated region
    $region42: #{onehot_ff_forward.1} parent=1 // pred_check
      _
    $region43: #{onehot_ff_forward.1} parent=1 // pred_check_branch
      %462 = sbr.rel (0) target = $region45
    $region44: #{onehot_ff_forward.1} parent=1 // pred_region
      _
    $region45: #{onehot_ff_forward.1} parent=1 // pred_fallthru
      _
    // Predicated region
    $region46: #{onehot_ff_forward.1} parent=1 // pred_check
      _
    $region47: #{onehot_ff_forward.1} parent=1 // pred_check_branch
      %464 = sbr.rel (0) target = $region49
    $region48: #{onehot_ff_forward.1} parent=1 // pred_region
      _
    $region49: #{onehot_ff_forward.1} parent=1 // pred_fallthru
      _
    %465 = vsyncpa [#allocation3], 1
    %466 = vsyncpa [#allocation5], 1

</llo_original>
